<compile_context>
chip_gen: v7x
topology: tpu7x:2x2x1
jax: 0.10.0
libtpu: 0.0.40
codegen_flags: <defaults>
</compile_context>

<pallas_src>
import functools

import jax
import jax.numpy as jnp
from jax.experimental import pallas as pl
from jax.experimental.pallas import tpu as pltpu


def _round_up(x, m):
    return ((x + m - 1) // m) * m


def _vmem_ceiling_bytes():
    """~80% of physical VMEM (leaves headroom for compiler-internal scratch)."""
    cap = 64 << 20
    try:
        info = pltpu.get_tpu_info()
        cap = int(getattr(info, "vmem_capacity_bytes", cap))
    except Exception:
        pass
    return max(16 << 20, int(cap * 0.80))


_batch_map = lambda i: (i, 0)
_const_map = lambda i: (0, 0)


def _weight_spec(shape):
    """VMEM-resident weight: constant index_map + single buffer (fetched once)."""
    try:
        return pl.BlockSpec(shape, _const_map, pipeline_mode=pl.Buffered(1))
    except TypeError:  # older jax without pipeline_mode on BlockSpec
        return pl.BlockSpec(shape, _const_map)


def _cvae_kernel(
    x_ref,         # [TB, D]   f32 inputs
    lab_ref,       # [TB, 1]   int32 class labels
    eps_ref,       # [TB, L]   f32 gaussian noise (reparameterization)
    w_enc_x_ref,   # [D, Hp]   bf16  encoder.linear, x part
    w_enc_y_ref,   # [C, Hp]   bf16  encoder.linear, one-hot part
    w_muvar_ref,   # [Hp, Lp2] bf16  fused mu||var head (zero-padded)
    w_dec1_z_ref,  # [L, Hp]   bf16  decoder.latent_to_hidden, latent part
    w_dec1_y_ref,  # [C, Hp]   bf16  decoder.latent_to_hidden, one-hot part
    w_dec2_ref,    # [Hp, Dp]  bf16  decoder.hidden_to_out (zero-padded)
    bias_ref,      # [4, BMAX] f32   packed biases [b_enc | b_muvar | b_dec1 | b_dec2]
    pred_ref,      # out: [TB, Dp]  f32
    muvar_ref,     # out: [TB, Lp2] f32   packed [z_mu | z_var | 0-pad]
):
    f32 = jnp.float32
    bf16 = jnp.bfloat16

    TB = x_ref.shape[0]
    C = w_enc_y_ref.shape[0]
    Hp = w_enc_x_ref.shape[1]
    L = eps_ref.shape[1]
    Dp = w_dec2_ref.shape[1]
    Lp2 = w_muvar_ref.shape[1]

    x = x_ref[...].astype(bf16)
    eps = eps_ref[...]
    lab = lab_ref[...]                                   # [TB, 1] int32

    # In-kernel one-hot (iota == label): no f32 one-hot HBM stream.
    onehot = (jax.lax.broadcasted_iota(jnp.int32, (TB, C), 1) == lab).astype(bf16)

    b_enc = bias_ref[0:1, :Hp]
    b_muvar = bias_ref[1:2, :Lp2]
    b_dec1 = bias_ref[2:3, :Hp]
    b_dec2 = bias_ref[3:4, :Dp]

    # ---------------- Encoder (split matmul == concat([x, onehot]) @ W) -----
    h = (jnp.dot(x, w_enc_x_ref[...], preferred_element_type=f32)
         + jnp.dot(onehot, w_enc_y_ref[...], preferred_element_type=f32)
         + b_enc)
    h = jnp.maximum(h, 0.0)                              # ReLU (padded cols stay 0)

    # Fused mu/var heads: one [Hp, Lp2] matmul, lane-dense output.
    muvar = (jnp.dot(h.astype(bf16), w_muvar_ref[...], preferred_element_type=f32)
             + b_muvar)
    z_mu = muvar[:, :L]
    z_var = muvar[:, L:2 * L]

    # ---------------- Reparameterization (f32 epilogue) ---------------------
    std = jnp.exp(z_var * 0.5)
    x_sample = (eps * std + z_mu).astype(bf16)

    # ---------------- Decoder (split matmul == concat([z, onehot]) @ W) -----
    hd = (jnp.dot(x_sample, w_dec1_z_ref[...], preferred_element_type=f32)
          + jnp.dot(onehot, w_dec1_y_ref[...], preferred_element_type=f32)
          + b_dec1)
    hd = jnp.maximum(hd, 0.0)                            # ReLU

    logits = (jnp.dot(hd.astype(bf16), w_dec2_ref[...], preferred_element_type=f32)
              + b_dec2)

    # Lane-dense full-block stores (Dp, Lp2 are multiples of 128).
    pred_ref[...] = jax.nn.sigmoid(logits)
    muvar_ref[...] = muvar


@functools.partial(jax.jit, static_argnames=("n_classes",))
def cvae_forward(x, y, eps, params, n_classes):
    """CVAE forward.

    x:   [B, input_dim] float32
    y:   [B]            int32 class labels (< n_classes)
    eps: [B, latent]    float32 noise (torch.randn_like equivalent)
    """
    B, D = x.shape
    C = n_classes
    Hp = params["w_enc_x"].shape[1]      # hidden padded to multiple of 128
    L = params["w_dec1_z"].shape[0]
    Dp = params["w_dec2"].shape[1]       # input_dim padded to multiple of 128
    Lp2 = params["w_muvar"].shape[1]     # 2*latent padded to multiple of 128

    # aux['y'] (the module returns the one-hot); kernel itself uses int labels.
    onehot_out = jax.nn.one_hot(y, n_classes, dtype=x.dtype)
    labels = y.astype(jnp.int32).reshape(B, 1)

    weights = (
        params["w_enc_x"], params["w_enc_y"], params["w_muvar"],
        params["w_dec1_z"], params["w_dec1_y"], params["w_dec2"],
        params["bias_slab"],
    )
    weight_bytes = sum(int(w.size) * w.dtype.itemsize for w in weights)
    vmem_ceiling = _vmem_ceiling_bytes()

    def tile_vmem(tb):
        # single-buffered weights + double-buffered activation tiles + scratch
        in_tile = tb * (D * 4 + 4 + L * 4)                  # x, label, eps
        out_tile = tb * (Dp + Lp2) * 4
        scratch = tb * (2 * Hp + Lp2 + Dp + 2 * L + C) * 4  # h, hd, muvar, logits, ...
        return weight_bytes + 2 * (in_tile + out_tile) + scratch

    # ---- batch tiling -------------------------------------------------------
    # Big tiles amortize the ~0.35us/step pipeline overhead; for large batches
    # keep >=2 grid steps so the "parallel" axis shards across v7x's 2 TCs.
    B8 = _round_up(B, 8)
    if B8 >= 512:
        TB = min(1024, 256 * max(1, B8 // 512))   # 256-aligned rows, >=2 steps
    else:
        TB = B8                                    # small batch: one step
    while TB > 8 and tile_vmem(TB) > vmem_ceiling:
        TB = max(8, _round_up(TB // 2, 8))

    Bp = _round_up(B, TB)
    xs, labs, eps_s = x, labels, eps
    if Bp != B:
        pr = Bp - B
        xs = jnp.pad(xs, ((0, pr), (0, 0)))
        labs = jnp.pad(labs, ((0, pr), (0, 0)))
        eps_s = jnp.pad(eps_s, ((0, pr), (0, 0)))
    grid = (Bp // TB,)

    in_specs = [
        pl.BlockSpec((TB, D), _batch_map),
        pl.BlockSpec((TB, 1), _batch_map),
        pl.BlockSpec((TB, L), _batch_map),
    ] + [_weight_spec(w.shape) for w in weights]

    out_specs = (
        pl.BlockSpec((TB, Dp), _batch_map),
        pl.BlockSpec((TB, Lp2), _batch_map),
    )
    out_shape = (
        jax.ShapeDtypeStruct((Bp, Dp), jnp.float32),
        jax.ShapeDtypeStruct((Bp, Lp2), jnp.float32),
    )

    vmem_bytes = int(min(max(tile_vmem(TB) + (4 << 20), 16 << 20), vmem_ceiling))

    flops = 2 * Bp * (D * Hp + C * Hp + Hp * Lp2 + L * Hp + C * Hp + Hp * Dp)
    transcendentals = Bp * (L + Dp)                 # exp in reparam + sigmoid
    bytes_accessed = (Bp * ((D + L) * 4 + 4)        # inputs (weights DMA'd once)
                      + weight_bytes
                      + Bp * (Dp + Lp2) * 4)        # outputs
    # TODO(synk): pred could be emitted as bfloat16 (largest HBM stream) if the
    # caller tolerates it; kept f32 to preserve the module's output precision.

    pred_p, muvar_p = pl.pallas_call(
        _cvae_kernel,
        out_shape=out_shape,
        grid=grid,
        in_specs=in_specs,
        out_specs=out_specs,
        compiler_params=pltpu.CompilerParams(
            dimension_semantics=("parallel",),
            vmem_limit_bytes=vmem_bytes,
        ),
        cost_estimate=pl.CostEstimate(
            flops=int(flops),
            transcendentals=int(transcendentals),
            bytes_accessed=int(bytes_accessed),
        ),
    )(xs, labs, eps_s, *weights)

    pred = pred_p[:B, :D]
    z_mu = muvar_p[:B, :L]
    z_var = muvar_p[:B, L:2 * L]
    return pred, {"z_mu": z_mu, "z_var": z_var, "y": onehot_out}


def init_params(key, input_dim, hidden_dim, latent_dim, n_classes):
    """Parameter init (uniform, PyTorch-Linear-style bounds).

    Kernel-side weights are split (x / one-hot parts), fused (mu||var), padded
    to lane-dense widths (hidden, 2*latent, input -> multiples of 128) and cast
    to bf16; biases are packed into a single f32 [4, BMAX] slab. Full-precision
    originals are kept for the pure-JAX reference.
    """
    def linear(k, fan_in, fan_out):
        kw, kb = jax.random.split(k)
        bound = 1.0 / jnp.sqrt(jnp.float32(fan_in))
        w = jax.random.uniform(kw, (fan_in, fan_out), jnp.float32, -bound, bound)
        b = jax.random.uniform(kb, (1, fan_out), jnp.float32, -bound, bound)
        return w, b

    keys = jax.random.split(key, 5)
    w_enc1, b_enc1 = linear(keys[0], input_dim + n_classes, hidden_dim)
    w_mu, b_mu = linear(keys[1], hidden_dim, latent_dim)
    w_var, b_var = linear(keys[2], hidden_dim, latent_dim)
    w_dec1, b_dec1 = linear(keys[3], latent_dim + n_classes, hidden_dim)
    w_dec2, b_dec2 = linear(keys[4], hidden_dim, input_dim)

    Hp = _round_up(hidden_dim, 128)
    Dp = _round_up(input_dim, 128)
    Lp2 = _round_up(2 * latent_dim, 128)
    pad_h_cols = ((0, 0), (0, Hp - hidden_dim))

    w_muvar = jnp.concatenate([w_mu, w_var], axis=1)          # [H, 2L]
    b_muvar = jnp.concatenate([b_mu, b_var], axis=1)          # [1, 2L]

    w_enc_x = jnp.pad(w_enc1[:input_dim, :], pad_h_cols)      # [D, Hp]
    w_enc_y = jnp.pad(w_enc1[input_dim:, :], pad_h_cols)      # [C, Hp]
    b_enc_p = jnp.pad(b_enc1, pad_h_cols)                     # [1, Hp]
    w_muvar_p = jnp.pad(w_muvar, ((0, Hp - hidden_dim), (0, Lp2 - 2 * latent_dim)))
    b_muvar_p = jnp.pad(b_muvar, ((0, 0), (0, Lp2 - 2 * latent_dim)))
    w_dec1_z = jnp.pad(w_dec1[:latent_dim, :], pad_h_cols)    # [L, Hp]
    w_dec1_y = jnp.pad(w_dec1[latent_dim:, :], pad_h_cols)    # [C, Hp]
    b_dec1_p = jnp.pad(b_dec1, pad_h_cols)                    # [1, Hp]
    w_dec2_p = jnp.pad(w_dec2, ((0, Hp - hidden_dim), (0, Dp - input_dim)))
    b_dec2_p = jnp.pad(b_dec2, ((0, 0), (0, Dp - input_dim)))

    bmax = max(Hp, Lp2, Dp)
    pad_row = lambda b: jnp.pad(b, ((0, 0), (0, bmax - b.shape[1])))
    bias_slab = jnp.concatenate(
        [pad_row(b_enc_p), pad_row(b_muvar_p), pad_row(b_dec1_p), pad_row(b_dec2_p)],
        axis=0)                                               # [4, bmax] f32

    bf16 = jnp.bfloat16
    return {
        # kernel-side parameters (split / fused / lane-padded / bf16)
        "w_enc_x": w_enc_x.astype(bf16),
        "w_enc_y": w_enc_y.astype(bf16),
        "w_muvar": w_muvar_p.astype(bf16),
        "w_dec1_z": w_dec1_z.astype(bf16),
        "w_dec1_y": w_dec1_y.astype(bf16),
        "w_dec2": w_dec2_p.astype(bf16),
        "bias_slab": bias_slab,
        # full-precision originals for the pure-JAX reference
        "w_enc1": w_enc1, "b_enc1": b_enc1,
        "w_mu": w_mu, "b_mu": b_mu,
        "w_var": w_var, "b_var": b_var,
        "w_dec1": w_dec1, "b_dec1": b_dec1,
        "w_dec2_raw": w_dec2, "b_dec2": b_dec2,
    }


def _reference_forward_f32(x, y, eps, params, n_classes):
    """Full-precision pure-JAX reference matching the PyTorch semantics."""
    onehot = jax.nn.one_hot(y, n_classes, dtype=x.dtype)
    xcat = jnp.concatenate([x, onehot], axis=1)
    h = jax.nn.relu(xcat @ params["w_enc1"] + params["b_enc1"])
    z_mu = h @ params["w_mu"] + params["b_mu"]
    z_var = h @ params["w_var"] + params["b_var"]
    std = jnp.exp(z_var / 2.0)
    x_sample = eps * std + z_mu
    dcat = jnp.concatenate([x_sample, onehot], axis=1)
    hd = jax.nn.relu(dcat @ params["w_dec1"] + params["b_dec1"])
    pred = jax.nn.sigmoid(hd @ params["w_dec2_raw"] + params["b_dec2"])
    return pred, z_mu, z_var


def _reference_forward_bf16(x, y, eps, params, n_classes):
    """Pure-JAX mirror of the kernel math (bf16 MXU operands, f32 accumulation)."""
    f32, bf = jnp.float32, jnp.bfloat16
    D, L = x.shape[1], eps.shape[1]
    Hp = params["w_enc_x"].shape[1]
    Lp2 = params["w_muvar"].shape[1]
    Dp = params["w_dec2"].shape[1]
    b = params["bias_slab"]
    onehot = jax.nn.one_hot(y, n_classes, dtype=bf)
    h = jnp.maximum(
        jnp.dot(x.astype(bf), params["w_enc_x"], preferred_element_type=f32)
        + jnp.dot(onehot, params["w_enc_y"], preferred_element_type=f32)
        + b[0:1, :Hp], 0.0)
    muvar = (jnp.dot(h.astype(bf), params["w_muvar"], preferred_element_type=f32)
             + b[1:2, :Lp2])
    z_mu, z_var = muvar[:, :L], muvar[:, L:2 * L]
    x_sample = (eps * jnp.exp(z_var * 0.5) + z_mu).astype(bf)
    hd = jnp.maximum(
        jnp.dot(x_sample, params["w_dec1_z"], preferred_element_type=f32)
        + jnp.dot(onehot, params["w_dec1_y"], preferred_element_type=f32)
        + b[2:3, :Hp], 0.0)
    logits = (jnp.dot(hd.astype(bf), params["w_dec2"], preferred_element_type=f32)
              + b[3:4, :Dp])
    return jax.nn.sigmoid(logits)[:, :D], z_mu, z_var


if __name__ == "__main__":
    # Small shapes consistent with the module's forward:
    #   x: [batch, input_dim], y: [batch] integer labels.
    B, INPUT_DIM, HIDDEN_DIM, LATENT_DIM, N_CLASSES = 8, 64, 32, 16, 8

    key = jax.random.PRNGKey(0)
    k_params, k_x, k_y, k_eps = jax.random.split(key, 4)

    params = init_params(k_params, INPUT_DIM, HIDDEN_DIM, LATENT_DIM, N_CLASSES)
    x = jax.random.uniform(k_x, (B, INPUT_DIM), jnp.float32)
    y = jax.random.randint(k_y, (B,), 0, N_CLASSES, dtype=jnp.int32)
    # TODO(synk): torch.randn_like noise is generated host-side and fed in as
    # `eps` (deterministic), rather than drawn with the in-kernel PRNG.
    eps = jax.random.normal(k_eps, (B, LATENT_DIM), jnp.float32)

    pred, aux = cvae_forward(x, y, eps, params, N_CLASSES)
    jax.block_until_ready((pred, aux))

    # Tight check vs. a pure-JAX mirror of the kernel math (same bf16 rounding).
    pm, zm, zv = _reference_forward_bf16(x, y, eps, params, N_CLASSES)
    assert jnp.allclose(pred, pm, atol=1e-3), "pred mismatch (bf16 mirror)"
    assert jnp.allclose(aux["z_mu"], zm, atol=1e-3), "z_mu mismatch (bf16 mirror)"
    assert jnp.allclose(aux["z_var"], zv, atol=1e-3), "z_var mismatch (bf16 mirror)"

    # Loose check vs. the full-precision PyTorch-semantics reference (bf16 weights).
    pf, zmf, zvf = _reference_forward_f32(x, y, eps, params, N_CLASSES)
    assert jnp.allclose(pred, pf, atol=5e-2), "pred mismatch (f32 reference)"
    assert jnp.allclose(aux["z_mu"], zmf, atol=5e-2), "z_mu mismatch (f32 reference)"
    assert jnp.allclose(aux["z_var"], zvf, atol=5e-2), "z_var mismatch (f32 reference)"

    assert pred.shape == (B, INPUT_DIM)
    assert aux["z_mu"].shape == (B, LATENT_DIM)
    assert aux["z_var"].shape == (B, LATENT_DIM)
    assert aux["y"].shape == (B, N_CLASSES)

    # Second run with a larger batch to exercise the multi-step batch grid
    # (TB=256, grid of 3 with padded rows) and the parallel-axis path.
    B2 = 520
    k_x2, k_y2, k_e2 = jax.random.split(jax.random.PRNGKey(1), 3)
    x2 = jax.random.uniform(k_x2, (B2, INPUT_DIM), jnp.float32)
    y2 = jax.random.randint(k_y2, (B2,), 0, N_CLASSES, dtype=jnp.int32)
    eps2 = jax.random.normal(k_e2, (B2, LATENT_DIM), jnp.float32)
    pred2, aux2 = cvae_forward(x2, y2, eps2, params, N_CLASSES)
    jax.block_until_ready((pred2, aux2))
    pm2, zm2, zv2 = _reference_forward_bf16(x2, y2, eps2, params, N_CLASSES)
    assert jnp.allclose(pred2, pm2, atol=1e-3), "pred mismatch (batch 520)"
    assert jnp.allclose(aux2["z_mu"], zm2, atol=1e-3), "z_mu mismatch (batch 520)"
    assert jnp.allclose(aux2["z_var"], zv2, atol=1e-3), "z_var mismatch (batch 520)"
    assert pred2.shape == (B2, INPUT_DIM)

    print("KERNEL_OK")
</pallas_src>

<mosaic_0001>
module attributes {stable_mosaic.version = 11 : i64} {
  func.func @_cvae_kernel(%arg0: i32, %arg1: memref<8x64xf32, #tpu.memory_space<vmem>>, %arg2: memref<8x1xi32, #tpu.memory_space<vmem>>, %arg3: memref<8x16xf32, #tpu.memory_space<vmem>>, %arg4: memref<64x128xbf16, #tpu.memory_space<vmem>>, %arg5: memref<8x128xbf16, #tpu.memory_space<vmem>>, %arg6: memref<128x128xbf16, #tpu.memory_space<vmem>>, %arg7: memref<16x128xbf16, #tpu.memory_space<vmem>>, %arg8: memref<8x128xbf16, #tpu.memory_space<vmem>>, %arg9: memref<128x128xbf16, #tpu.memory_space<vmem>>, %arg10: memref<4x128xf32, #tpu.memory_space<vmem>>, %arg11: memref<8x128xf32, #tpu.memory_space<vmem>>, %arg12: memref<8x128xf32, #tpu.memory_space<vmem>>) attributes {dimension_semantics = [#tpu.dimension_semantics<parallel>], iteration_bounds = array<i64: 1>, scalar_prefetch = 0 : i64, scratch_operands = 0 : i64, tpu.core_type = #tpu.core_type<tc>, window_params = [{transform_indices = @transform_0, window_bounds = array<i64: 8, 64>}, {transform_indices = @transform_1, window_bounds = array<i64: 8, 1>}, {transform_indices = @transform_2, window_bounds = array<i64: 8, 16>}, {pipeline_mode = #tpu.pipeline_mode<synchronous>, transform_indices = @transform_3, window_bounds = array<i64: 64, 128>}, {pipeline_mode = #tpu.pipeline_mode<synchronous>, transform_indices = @transform_4, window_bounds = array<i64: 8, 128>}, {pipeline_mode = #tpu.pipeline_mode<synchronous>, transform_indices = @transform_5, window_bounds = array<i64: 128, 128>}, {pipeline_mode = #tpu.pipeline_mode<synchronous>, transform_indices = @transform_6, window_bounds = array<i64: 16, 128>}, {pipeline_mode = #tpu.pipeline_mode<synchronous>, transform_indices = @transform_7, window_bounds = array<i64: 8, 128>}, {pipeline_mode = #tpu.pipeline_mode<synchronous>, transform_indices = @transform_8, window_bounds = array<i64: 128, 128>}, {pipeline_mode = #tpu.pipeline_mode<synchronous>, transform_indices = @transform_9, window_bounds = array<i64: 4, 128>}, {transform_indices = @transform_10, window_bounds = array<i64: 8, 128>}, {transform_indices = @transform_11, window_bounds = array<i64: 8, 128>}]} {
    %c0 = arith.constant 0 : index
    %c0_0 = arith.constant 0 : index
    %0 = vector.load %arg1[%c0, %c0_0] : memref<8x64xf32, #tpu.memory_space<vmem>>, vector<8x64xf32>
    %1 = arith.truncf %0 : vector<8x64xf32> to vector<8x64xbf16>
    %c0_1 = arith.constant 0 : index
    %c0_2 = arith.constant 0 : index
    %2 = vector.load %arg3[%c0_1, %c0_2] : memref<8x16xf32, #tpu.memory_space<vmem>>, vector<8x16xf32>
    %c0_3 = arith.constant 0 : index
    %c0_4 = arith.constant 0 : index
    %3 = vector.load %arg2[%c0_3, %c0_4] : memref<8x1xi32, #tpu.memory_space<vmem>>, vector<8x1xi32>
    %4 = tpu.iota {dimensions = array<i32: 1>} : vector<8x8xi32>
    %5 = vector.broadcast %3 : vector<8x1xi32> to vector<8x8xi32>
    %6 = arith.cmpi eq, %4, %5 : vector<8x8xi32>
    %7 = arith.extui %6 : vector<8x8xi1> to vector<8x8xi32>
    %8 = arith.sitofp %7 : vector<8x8xi32> to vector<8x8xf32>
    %9 = arith.truncf %8 : vector<8x8xf32> to vector<8x8xbf16>
    %c0_5 = arith.constant 0 : index
    %c0_6 = arith.constant 0 : index
    %10 = vector.load %arg10[%c0_5, %c0_6] : memref<4x128xf32, #tpu.memory_space<vmem>>, vector<1x128xf32>
    %c1 = arith.constant 1 : index
    %c0_7 = arith.constant 0 : index
    %11 = vector.load %arg10[%c1, %c0_7] : memref<4x128xf32, #tpu.memory_space<vmem>>, vector<1x128xf32>
    %c2 = arith.constant 2 : index
    %c0_8 = arith.constant 0 : index
    %12 = vector.load %arg10[%c2, %c0_8] : memref<4x128xf32, #tpu.memory_space<vmem>>, vector<1x128xf32>
    %c3 = arith.constant 3 : index
    %c0_9 = arith.constant 0 : index
    %13 = vector.load %arg10[%c3, %c0_9] : memref<4x128xf32, #tpu.memory_space<vmem>>, vector<1x128xf32>
    %c0_10 = arith.constant 0 : index
    %c0_11 = arith.constant 0 : index
    %14 = vector.load %arg4[%c0_10, %c0_11] : memref<64x128xbf16, #tpu.memory_space<vmem>>, vector<64x128xbf16>
    %cst = arith.constant dense<0.000000e+00> : vector<8x128xf32>
    %15 = tpu.matmul %1, %14, %cst {dimension_numbers = #tpu.dot_dimension_numbers<[1], [0], [0], [1], [0, 0, 1, 1], [], []>} : vector<8x64xbf16>, vector<64x128xbf16>, vector<8x128xf32> -> vector<8x128xf32>
    %c0_12 = arith.constant 0 : index
    %c0_13 = arith.constant 0 : index
    %16 = vector.load %arg5[%c0_12, %c0_13] : memref<8x128xbf16, #tpu.memory_space<vmem>>, vector<8x128xbf16>
    %cst_14 = arith.constant dense<0.000000e+00> : vector<8x128xf32>
    %17 = tpu.matmul %9, %16, %cst_14 {dimension_numbers = #tpu.dot_dimension_numbers<[1], [0], [0], [1], [0, 0, 1, 1], [], []>} : vector<8x8xbf16>, vector<8x128xbf16>, vector<8x128xf32> -> vector<8x128xf32>
    %18 = arith.addf %15, %17 : vector<8x128xf32>
    %19 = vector.broadcast %10 : vector<1x128xf32> to vector<8x128xf32>
    %20 = arith.addf %18, %19 : vector<8x128xf32>
    %cst_15 = arith.constant 0.000000e+00 : f32
    %21 = vector.broadcast %cst_15 : f32 to vector<8x128xf32>
    %22 = arith.maximumf %20, %21 : vector<8x128xf32>
    %23 = arith.truncf %22 : vector<8x128xf32> to vector<8x128xbf16>
    %c0_16 = arith.constant 0 : index
    %c0_17 = arith.constant 0 : index
    %24 = vector.load %arg6[%c0_16, %c0_17] : memref<128x128xbf16, #tpu.memory_space<vmem>>, vector<128x128xbf16>
    %cst_18 = arith.constant dense<0.000000e+00> : vector<8x128xf32>
    %25 = tpu.matmul %23, %24, %cst_18 {dimension_numbers = #tpu.dot_dimension_numbers<[1], [0], [0], [1], [0, 0, 1, 1], [], []>} : vector<8x128xbf16>, vector<128x128xbf16>, vector<8x128xf32> -> vector<8x128xf32>
    %26 = vector.broadcast %11 : vector<1x128xf32> to vector<8x128xf32>
    %27 = arith.addf %25, %26 : vector<8x128xf32>
    %28 = vector.extract_strided_slice %27 {offsets = [0, 0], sizes = [8, 16], strides = [1, 1]} : vector<8x128xf32> to vector<8x16xf32>
    %29 = vector.extract_strided_slice %27 {offsets = [0, 16], sizes = [8, 16], strides = [1, 1]} : vector<8x128xf32> to vector<8x16xf32>
    %cst_19 = arith.constant 5.000000e-01 : f32
    %30 = vector.broadcast %cst_19 : f32 to vector<8x16xf32>
    %31 = arith.mulf %29, %30 : vector<8x16xf32>
    %32 = math.exp %31 : vector<8x16xf32>
    %33 = arith.mulf %2, %32 : vector<8x16xf32>
    %34 = arith.addf %33, %28 : vector<8x16xf32>
    %35 = arith.truncf %34 : vector<8x16xf32> to vector<8x16xbf16>
    %c0_20 = arith.constant 0 : index
    %c0_21 = arith.constant 0 : index
    %36 = vector.load %arg7[%c0_20, %c0_21] : memref<16x128xbf16, #tpu.memory_space<vmem>>, vector<16x128xbf16>
    %cst_22 = arith.constant dense<0.000000e+00> : vector<8x128xf32>
    %37 = tpu.matmul %35, %36, %cst_22 {dimension_numbers = #tpu.dot_dimension_numbers<[1], [0], [0], [1], [0, 0, 1, 1], [], []>} : vector<8x16xbf16>, vector<16x128xbf16>, vector<8x128xf32> -> vector<8x128xf32>
    %c0_23 = arith.constant 0 : index
    %c0_24 = arith.constant 0 : index
    %38 = vector.load %arg8[%c0_23, %c0_24] : memref<8x128xbf16, #tpu.memory_space<vmem>>, vector<8x128xbf16>
    %cst_25 = arith.constant dense<0.000000e+00> : vector<8x128xf32>
    %39 = tpu.matmul %9, %38, %cst_25 {dimension_numbers = #tpu.dot_dimension_numbers<[1], [0], [0], [1], [0, 0, 1, 1], [], []>} : vector<8x8xbf16>, vector<8x128xbf16>, vector<8x128xf32> -> vector<8x128xf32>
    %40 = arith.addf %37, %39 : vector<8x128xf32>
    %41 = vector.broadcast %12 : vector<1x128xf32> to vector<8x128xf32>
    %42 = arith.addf %40, %41 : vector<8x128xf32>
    %cst_26 = arith.constant 0.000000e+00 : f32
    %43 = vector.broadcast %cst_26 : f32 to vector<8x128xf32>
    %44 = arith.maximumf %42, %43 : vector<8x128xf32>
    %45 = arith.truncf %44 : vector<8x128xf32> to vector<8x128xbf16>
    %c0_27 = arith.constant 0 : index
    %c0_28 = arith.constant 0 : index
    %46 = vector.load %arg9[%c0_27, %c0_28] : memref<128x128xbf16, #tpu.memory_space<vmem>>, vector<128x128xbf16>
    %cst_29 = arith.constant dense<0.000000e+00> : vector<8x128xf32>
    %47 = tpu.matmul %45, %46, %cst_29 {dimension_numbers = #tpu.dot_dimension_numbers<[1], [0], [0], [1], [0, 0, 1, 1], [], []>} : vector<8x128xbf16>, vector<128x128xbf16>, vector<8x128xf32> -> vector<8x128xf32>
    %48 = vector.broadcast %13 : vector<1x128xf32> to vector<8x128xf32>
    %49 = arith.addf %47, %48 : vector<8x128xf32>
    %50 = arith.negf %49 : vector<8x128xf32>
    %51 = math.exp %50 : vector<8x128xf32>
    %cst_30 = arith.constant 1.000000e+00 : f32
    %52 = vector.broadcast %cst_30 : f32 to vector<8x128xf32>
    %53 = arith.addf %52, %51 : vector<8x128xf32>
    %54 = arith.divf %52, %53 : vector<8x128xf32>
    %c0_31 = arith.constant 0 : index
    %c0_32 = arith.constant 0 : index
    %55 = vector.load %arg11[%c0_31, %c0_32] : memref<8x128xf32, #tpu.memory_space<vmem>>, vector<8x128xf32>
    tpu.vector_store %arg11[%c0_31, %c0_32], %54 {strides = array<i32>} : memref<8x128xf32, #tpu.memory_space<vmem>>, vector<8x128xf32>,
    %c0_33 = arith.constant 0 : index
    %c0_34 = arith.constant 0 : index
    %56 = vector.load %arg12[%c0_33, %c0_34] : memref<8x128xf32, #tpu.memory_space<vmem>>, vector<8x128xf32>
    tpu.vector_store %arg12[%c0_33, %c0_34], %27 {strides = array<i32>} : memref<8x128xf32, #tpu.memory_space<vmem>>, vector<8x128xf32>,
    return
  }
  func.func @transform_0(%arg0: i32) -> (i32, i32) {
    %c0_i32 = arith.constant 0 : i32
    %c0_i32_0 = arith.constant 0 : i32
    return %arg0, %c0_i32 : i32, i32
  }
  func.func @transform_1(%arg0: i32) -> (i32, i32) {
    %c0_i32 = arith.constant 0 : i32
    %c0_i32_0 = arith.constant 0 : i32
    return %arg0, %c0_i32 : i32, i32
  }
  func.func @transform_2(%arg0: i32) -> (i32, i32) {
    %c0_i32 = arith.constant 0 : i32
    %c0_i32_0 = arith.constant 0 : i32
    return %arg0, %c0_i32 : i32, i32
  }
  func.func @transform_3(%arg0: i32) -> (i32, i32) {
    %c0_i32 = arith.constant 0 : i32
    %c0_i32_0 = arith.constant 0 : i32
    %c0_i32_1 = arith.constant 0 : i32
    return %c0_i32, %c0_i32_0 : i32, i32
  }
  func.func @transform_4(%arg0: i32) -> (i32, i32) {
    %c0_i32 = arith.constant 0 : i32
    %c0_i32_0 = arith.constant 0 : i32
    %c0_i32_1 = arith.constant 0 : i32
    return %c0_i32, %c0_i32_0 : i32, i32
  }
  func.func @transform_5(%arg0: i32) -> (i32, i32) {
    %c0_i32 = arith.constant 0 : i32
    %c0_i32_0 = arith.constant 0 : i32
    %c0_i32_1 = arith.constant 0 : i32
    return %c0_i32, %c0_i32_0 : i32, i32
  }
  func.func @transform_6(%arg0: i32) -> (i32, i32) {
    %c0_i32 = arith.constant 0 : i32
    %c0_i32_0 = arith.constant 0 : i32
    %c0_i32_1 = arith.constant 0 : i32
    return %c0_i32, %c0_i32_0 : i32, i32
  }
  func.func @transform_7(%arg0: i32) -> (i32, i32) {
    %c0_i32 = arith.constant 0 : i32
    %c0_i32_0 = arith.constant 0 : i32
    %c0_i32_1 = arith.constant 0 : i32
    return %c0_i32, %c0_i32_0 : i32, i32
  }
  func.func @transform_8(%arg0: i32) -> (i32, i32) {
    %c0_i32 = arith.constant 0 : i32
    %c0_i32_0 = arith.constant 0 : i32
    %c0_i32_1 = arith.constant 0 : i32
    return %c0_i32, %c0_i32_0 : i32, i32
  }
  func.func @transform_9(%arg0: i32) -> (i32, i32) {
    %c0_i32 = arith.constant 0 : i32
    %c0_i32_0 = arith.constant 0 : i32
    %c0_i32_1 = arith.constant 0 : i32
    return %c0_i32, %c0_i32_0 : i32, i32
  }
  func.func @transform_10(%arg0: i32) -> (i32, i32) {
    %c0_i32 = arith.constant 0 : i32
    %c0_i32_0 = arith.constant 0 : i32
    return %arg0, %c0_i32 : i32, i32
  }
  func.func @transform_11(%arg0: i32) -> (i32, i32) {
    %c0_i32 = arith.constant 0 : i32
    %c0_i32_0 = arith.constant 0 : i32
    return %arg0, %c0_i32 : i32, i32
  }
}

</mosaic_0001>

<llo_original>
// kernel: cvae_forward.1
$region0: #{cvae_forward.1}
  #allocation0 [shape = 'u32[]', space=smem, size = 0x4, offset = 0x4, fixed_abs, tag = 'smem constant byte address 0x4 - core index']
  #allocation1 [shape = 'u32[144,128]{1,0:T(1,128)}', space=vmem, size = 0x12000, scoped, tag = 'internal scratch']
  %s0 = inlined_call_operand.vmem [shape: f32[8,64], index: 0, kind: input, shape index: {}]
  %s1 = inlined_call_operand.vmem [shape: s32[8,1], index: 1, kind: input, shape index: {}]
  %s2 = inlined_call_operand.vmem [shape: f32[8,16], index: 2, kind: input, shape index: {}]
  %s3 = inlined_call_operand.hbm [shape: bf16[64,128], index: 3, kind: input, shape index: {}]
  %s4 = inlined_call_operand.hbm [shape: bf16[8,128], index: 4, kind: input, shape index: {}]
  %s5 = inlined_call_operand.hbm [shape: bf16[128,128], index: 5, kind: input, shape index: {}]
  %s6 = inlined_call_operand.vmem [shape: bf16[16,128], index: 6, kind: input, shape index: {}]
  %s7 = inlined_call_operand.vmem [shape: bf16[8,128], index: 7, kind: input, shape index: {}]
  %s8 = inlined_call_operand.hbm [shape: bf16[128,128], index: 8, kind: input, shape index: {}]
  %s9 = inlined_call_operand.vmem [shape: f32[4,128], index: 9, kind: input, shape index: {}]
  %s10 = inlined_call_operand.hbm [shape: f32[8,128], index: 10, kind: output, shape index: {0}]
  %s11 = inlined_call_operand.vmem [shape: f32[8,128], index: 11, kind: output, shape index: {1}]
  %12 = xla_tuple %s10, %s11
  %s13 = sld [smem:[#allocation0]]
  $region74: #{cvae_forward.1} parent=0
    _
  %s15 = ssub.s32 1, %s13
  %s16 = scalar_select 0, %s15, %s13
  $region1: #{cvae_forward.1} parent=0
    #allocation2 [shape = 'u8[16384]{0}', space=vmem, size = 0x4000, scoped, tag = 'input window, operand 3, single buffered']
    #allocation3 [shape = 's32[1]{0}', space=sflag, size = 0x4, scoped, tag = 'scoped memory for cvae_forward.1']
    #allocation4 [shape = 's32[1]{0}', space=sflag, size = 0x4, scoped, tag = 'scoped memory for cvae_forward.1']
    #allocation5 [shape = 'u8[2048]{0}', space=vmem, size = 0x800, scoped, tag = 'input window, operand 4, single buffered']
    #allocation6 [shape = 's32[1]{0}', space=sflag, size = 0x4, scoped, tag = 'scoped memory for cvae_forward.1']
    #allocation7 [shape = 'u8[32768]{0}', space=vmem, size = 0x8000, scoped, tag = 'input window, operand 5, single buffered']
    #allocation8 [shape = 'u8[32768]{0}', space=vmem, size = 0x8000, scoped, tag = 'input window, operand 8, single buffered']
    #allocation9 [shape = 's32[1]{0}', space=sflag, size = 0x4, scoped, tag = 'scoped memory for cvae_forward.1']
    #allocation10 [shape = 'u8[4096]{0}', space=vmem, size = 0x1000, scoped, tag = 'output window, operand 0, single buffered']
    %17 = vsyncpa [#allocation3], 0
    %18 = vsyncpa [#allocation6], 0
    %19 = vsyncpa [#allocation9], 0
    %20 = vsyncpa [#allocation4], 0
    // Predicated region
    $region2: #{cvae_forward.1} parent=1 // pred_check
      _
    $region3: #{cvae_forward.1} parent=1 // pred_check_branch
      %22 = sbr.rel (0) target = $region5
    $region4: #{cvae_forward.1} parent=1 // pred_region
      _
    $region5: #{cvae_forward.1} parent=1 // pred_fallthru
      _
    // Predicated region
    $region6: #{cvae_forward.1} parent=1 // pred_check
      _
    $region7: #{cvae_forward.1} parent=1 // pred_check_branch
      %24 = sbr.rel (0) target = $region9
    $region8: #{cvae_forward.1} parent=1 // pred_region
      _
    $region9: #{cvae_forward.1} parent=1 // pred_fallthru
      _
    // Predicated region
    $region10: #{cvae_forward.1} parent=1 // pred_check
      _
    $region11: #{cvae_forward.1} parent=1 // pred_check_branch
      %26 = sbr.rel (0) target = $region13
    $region12: #{cvae_forward.1} parent=1 // pred_region
      _
    $region13: #{cvae_forward.1} parent=1 // pred_fallthru
      _
    // Predicated region
    $region14: #{cvae_forward.1} parent=1 // pred_check
      _
    $region15: #{cvae_forward.1} parent=1 // pred_check_branch
      %28 = sbr.rel (0) target = $region17
    $region16: #{cvae_forward.1} parent=1 // pred_region
      %s30 = ssub.s32 512, 512
      %31 = vsyncadd [#allocation3], %s30
      %s32 = sshll.u32 [#allocation2], 4
      %s33 = int_to_ptr.vmem [resolvable:$true] %s32
      %38 = dma.hbm_to_vmem [thread:$0]  %s3, 512, %s33, [#allocation3], 64, 64, 4
    $region17: #{cvae_forward.1} parent=1 // pred_fallthru
      _
    // Predicated region
    $region18: #{cvae_forward.1} parent=1 // pred_check
      _
    $region19: #{cvae_forward.1} parent=1 // pred_check_branch
      %40 = sbr.rel (0) target = $region21
    $region20: #{cvae_forward.1} parent=1 // pred_region
      %s42 = ssub.s32 64, 64
      %43 = vsyncadd [#allocation6], %s42
      %s45 = sshll.u32 [#allocation5], 4
      %s46 = int_to_ptr.vmem [resolvable:$true] %s45
      %48 = dma.hbm_to_vmem [thread:$0]  %s4, 64, %s46, [#allocation6]
    $region21: #{cvae_forward.1} parent=1 // pred_fallthru
      _
    // Predicated region
    $region22: #{cvae_forward.1} parent=1 // pred_check
      _
    $region23: #{cvae_forward.1} parent=1 // pred_check_branch
      %50 = sbr.rel (0) target = $region25
    $region24: #{cvae_forward.1} parent=1 // pred_region
      %s52 = ssub.s32 1024, 1024
      %53 = vsyncadd [#allocation6], %s52
      %s54 = sshll.u32 [#allocation7], 4
      %s55 = int_to_ptr.vmem [resolvable:$true] %s54
      %60 = dma.hbm_to_vmem [thread:$0]  %s5, 1024, %s55, [#allocation6], 64, 64, 4
    $region25: #{cvae_forward.1} parent=1 // pred_fallthru
      _
    // Predicated region
    $region26: #{cvae_forward.1} parent=1 // pred_check
      _
    $region27: #{cvae_forward.1} parent=1 // pred_check_branch
      %62 = sbr.rel (0) target = $region29
    $region28: #{cvae_forward.1} parent=1 // pred_region
      _
    $region29: #{cvae_forward.1} parent=1 // pred_fallthru
      _
    // Predicated region
    $region30: #{cvae_forward.1} parent=1 // pred_check
      _
    $region31: #{cvae_forward.1} parent=1 // pred_check_branch
      %64 = sbr.rel (0) target = $region33
    $region32: #{cvae_forward.1} parent=1 // pred_region
      _
    $region33: #{cvae_forward.1} parent=1 // pred_fallthru
      _
    // Predicated region
    $region34: #{cvae_forward.1} parent=1 // pred_check
      _
    $region35: #{cvae_forward.1} parent=1 // pred_check_branch
      %66 = sbr.rel (0) target = $region37
    $region36: #{cvae_forward.1} parent=1 // pred_region
      %s68 = ssub.s32 1024, 1024
      %69 = vsyncadd [#allocation9], %s68
      %s70 = sshll.u32 [#allocation8], 4
      %s71 = int_to_ptr.vmem [resolvable:$true] %s70
      %76 = dma.hbm_to_vmem [thread:$0]  %s8, 1024, %s71, [#allocation9], 64, 64, 4
    $region37: #{cvae_forward.1} parent=1 // pred_fallthru
      _
    // Predicated region
    $region38: #{cvae_forward.1} parent=1 // pred_check
      _
    $region39: #{cvae_forward.1} parent=1 // pred_check_branch
      %78 = sbr.rel (0) target = $region41
    $region40: #{cvae_forward.1} parent=1 // pred_region
      _
    $region41: #{cvae_forward.1} parent=1 // pred_fallthru
      _
    // Predicated region
    $region42: #{cvae_forward.1} parent=1 // pred_check
      _
    $region43: #{cvae_forward.1} parent=1 // pred_check_branch
      %80 = sbr.rel (0) target = $region45
    $region44: #{cvae_forward.1} parent=1 // pred_region
      %81 = dma.done [#allocation3], 512
    $region45: #{cvae_forward.1} parent=1 // pred_fallthru
      _
    // Predicated region
    $region46: #{cvae_forward.1} parent=1 // pred_check
      _
    $region47: #{cvae_forward.1} parent=1 // pred_check_branch
      %83 = sbr.rel (0) target = $region49
    $region48: #{cvae_forward.1} parent=1 // pred_region
      %84 = dma.done [#allocation6], 64
    $region49: #{cvae_forward.1} parent=1 // pred_fallthru
      _
    // Predicated region
    $region50: #{cvae_forward.1} parent=1 // pred_check
      _
    $region51: #{cvae_forward.1} parent=1 // pred_check_branch
      %86 = sbr.rel (0) target = $region53
    $region52: #{cvae_forward.1} parent=1 // pred_region
      %87 = dma.done [#allocation6], 1024
    $region53: #{cvae_forward.1} parent=1 // pred_fallthru
      _
    // Predicated region
    $region54: #{cvae_forward.1} parent=1 // pred_check
      _
    $region55: #{cvae_forward.1} parent=1 // pred_check_branch
      %89 = sbr.rel (0) target = $region57
    $region56: #{cvae_forward.1} parent=1 // pred_region
      %90 = dma.done [#allocation9], 1024
    $region57: #{cvae_forward.1} parent=1 // pred_fallthru
      _
    %v92 = vld [vmem:[%s0] sm:$0xff]
    %v93 = vpack.c.bf16 %v92, %v92
    %v94 = vld [vmem:[%s2] sm:$0xff]
    %v95 = vld [vmem:[%s1] sm:$0xff]
    %v96 = vlaneseq
    %v97 = vand.u32 %v96, 127
    %98 = vset.pattern.permute.xlu0 0
    %99 = vperm.xlu0 %98, %v95
    %v100 = vpop.permute.xlu0 %99
    %vm101 = vcmp.eq.s32.totalorder %v97, %v100
    %v102 = vsel %vm101, 1, 0
    %v103 = vcvt.s32.f32 %v102
    %v104 = vpack.c.bf16 %v103, %v103
    %v105 = vld [vmem:[%s9] sm:$0x1]
    %v106 = vld [vmem:[%s9 + $0x1] sm:$0x1]
    %v107 = vld [vmem:[%s9 + $0x2] sm:$0x1]
    %v108 = vld [vmem:[%s9 + $0x3] sm:$0x1]
    %v109 = vld [vmem:[#allocation2] sm:$0xf]
    %v110 = vld [vmem:[#allocation2 + $0x4] sm:$0xf]
    %v111 = vld [vmem:[#allocation2 + $0x8] sm:$0xf]
    %v112 = vld [vmem:[#allocation2 + $0xc] sm:$0xf]
    %v113 = vld [vmem:[#allocation2 + $0x10] sm:$0xf]
    %v114 = vld [vmem:[#allocation2 + $0x14] sm:$0xf]
    %v115 = vld [vmem:[#allocation2 + $0x18] sm:$0xf]
    %v116 = vld [vmem:[#allocation2 + $0x1c] sm:$0xf]
    %v117 = vld [vmem:[#allocation5] sm:$0xf]
    %vm118 = vcmask 64512
    %v120 = vsel %vm118, %v104, 0
    %vm122 = vcmask 1043456
    %v124 = vsel %vm122, %v117, 0
    %126 = vmatprep.subr.bf16.mxu0 0
    %127 = vmatpush1.bf16.msra.mxu0 %v124
    %128 = vmatprep.subr.bf16.mxu0 0
    %129 = vmatpush1.bf16.msra.mxu0 0
    %130 = vmatprep.subr.bf16.mxu0 0
    %131 = vmatpush1.bf16.msra.mxu0 0
    %132 = vmatprep.subr.bf16.mxu0 0
    %133 = vmatpush1.bf16.msra.mxu0 0
    %134 = vmatprep.subr.bf16.mxu0 0
    %135 = vmatpush1.bf16.msra.mxu0 0
    %136 = vmatprep.subr.bf16.mxu0 0
    %137 = vmatpush1.bf16.msra.mxu0 0
    %138 = vmatprep.subr.bf16.mxu0 0
    %139 = vmatpush1.bf16.msra.mxu0 0
    %140 = vmatprep.subr.bf16.mxu0 0
    %141 = vmatpush1.bf16.msra.mxu0 0
    %142 = vmatprep.subr.bf16.mxu0 0
    %143 = vmatpush1.bf16.msra.mxu0 0
    %144 = vmatprep.subr.bf16.mxu0 0
    %145 = vmatpush1.bf16.msra.mxu0 0
    %146 = vmatprep.subr.bf16.mxu0 0
    %147 = vmatpush1.bf16.msra.mxu0 0
    %148 = vmatprep.subr.bf16.mxu0 0
    %149 = vmatpush1.bf16.msra.mxu0 0
    %150 = vmatprep.subr.bf16.mxu0 0
    %151 = vmatpush1.bf16.msra.mxu0 0
    %152 = vmatprep.subr.bf16.mxu0 0
    %153 = vmatpush1.bf16.msra.mxu0 0
    %154 = vmatprep.subr.bf16.mxu0 0
    %155 = vmatpush1.bf16.msra.mxu0 0
    %156 = vmatprep.subr.bf16.mxu0 0
    %157 = vmatpush1.bf16.msra.mxu0 0
    %158 = vmatprep.mubr.bf16.mxu0 0
    %159 = vmatmul.mubr.bf16.gmra.mrb[0].mxu0 %v120
    %v160 = vpop.f32.mrb[0].mxu0
    %v161 = vadd.f32 0.0, %v160
    %v162 = vpop.f32.mrb[0].mxu0
    %v163 = vpop.f32.mrb[0].mxu0
    %v164 = vpop.f32.mrb[0].mxu0
    %165 = vdwg.mxu0
    %v174 = vunpack.c.l.b16 %v109
    %v175 = vunpack.c.l.b16 %v110
    %v176 = vunpack.c.l.b16 %v111
    %v177 = vunpack.c.l.b16 %v112
    %v178 = vunpack.c.l.b16 %v113
    %v179 = vunpack.c.l.b16 %v114
    %v180 = vunpack.c.l.b16 %v115
    %v181 = vunpack.c.l.b16 %v116
    %v182 = vpack.c.b16 %v175, %v174
    %v183 = vpack.c.b16 %v177, %v176
    %v184 = vpack.c.b16 %v179, %v178
    %v185 = vpack.c.b16 %v181, %v180
    %vm190 = vcmask 523264
    %v192 = vsel %vm190, %v93, 0
    %194 = vmatprep.subr.bf16.mxu0 0
    %195 = vmatpush1.bf16.msra.mxu0 %v182
    %196 = vmatprep.subr.bf16.mxu0 0
    %197 = vmatpush1.bf16.msra.mxu0 %v183
    %198 = vmatprep.subr.bf16.mxu0 0
    %199 = vmatpush1.bf16.msra.mxu0 %v184
    %200 = vmatprep.subr.bf16.mxu0 0
    %201 = vmatpush1.bf16.msra.mxu0 %v185
    %202 = vmatprep.subr.bf16.mxu0 0
    %203 = vmatpush1.bf16.msra.mxu0 0
    %204 = vmatprep.subr.bf16.mxu0 0
    %205 = vmatpush1.bf16.msra.mxu0 0
    %206 = vmatprep.subr.bf16.mxu0 0
    %207 = vmatpush1.bf16.msra.mxu0 0
    %208 = vmatprep.subr.bf16.mxu0 0
    %209 = vmatpush1.bf16.msra.mxu0 0
    %210 = vmatprep.subr.bf16.mxu0 0
    %211 = vmatpush1.bf16.msra.mxu0 0
    %212 = vmatprep.subr.bf16.mxu0 0
    %213 = vmatpush1.bf16.msra.mxu0 0
    %214 = vmatprep.subr.bf16.mxu0 0
    %215 = vmatpush1.bf16.msra.mxu0 0
    %216 = vmatprep.subr.bf16.mxu0 0
    %217 = vmatpush1.bf16.msra.mxu0 0
    %218 = vmatprep.subr.bf16.mxu0 0
    %219 = vmatpush1.bf16.msra.mxu0 0
    %220 = vmatprep.subr.bf16.mxu0 0
    %221 = vmatpush1.bf16.msra.mxu0 0
    %222 = vmatprep.subr.bf16.mxu0 0
    %223 = vmatpush1.bf16.msra.mxu0 0
    %224 = vmatprep.subr.bf16.mxu0 0
    %225 = vmatpush1.bf16.msra.mxu0 0
    %226 = vmatprep.mubr.bf16.mxu0 0
    %227 = vmatmul.mubr.bf16.gmra.mrb[0].mxu0 %v192
    %v228 = vpop.f32.mrb[0].mxu0
    %v229 = vadd.f32 %v161, %v228
    %v230 = vpop.f32.mrb[0].mxu0
    %v231 = vpop.f32.mrb[0].mxu0
    %v232 = vpop.f32.mrb[0].mxu0
    %233 = vdwg.mxu0
    %v234 = vlaneseq
    %v235 = vshrl.u32 %v234, 7
    %v236 = vsub.s32 0, %v235
    %v237 = vrot.slane %v105, %v236
    %v238 = vadd.f32 %v229, %v237
    %v239 = vmax.f32 %v238, 0.0
    %v240 = vpack.c.bf16 %v239, %v239
    %v241 = vld [vmem:[#allocation7] sm:$0xf]
    %v242 = vld [vmem:[#allocation7 + $0x4] sm:$0xf]
    %v243 = vld [vmem:[#allocation7 + $0x8] sm:$0xf]
    %v244 = vld [vmem:[#allocation7 + $0xc] sm:$0xf]
    %v245 = vld [vmem:[#allocation7 + $0x10] sm:$0xf]
    %v246 = vld [vmem:[#allocation7 + $0x14] sm:$0xf]
    %v247 = vld [vmem:[#allocation7 + $0x18] sm:$0xf]
    %v248 = vld [vmem:[#allocation7 + $0x1c] sm:$0xf]
    %v249 = vld [vmem:[#allocation7 + $0x20] sm:$0xf]
    %v250 = vld [vmem:[#allocation7 + $0x24] sm:$0xf]
    %v251 = vld [vmem:[#allocation7 + $0x28] sm:$0xf]
    %v252 = vld [vmem:[#allocation7 + $0x2c] sm:$0xf]
    %v253 = vld [vmem:[#allocation7 + $0x30] sm:$0xf]
    %v254 = vld [vmem:[#allocation7 + $0x34] sm:$0xf]
    %v255 = vld [vmem:[#allocation7 + $0x38] sm:$0xf]
    %v256 = vld [vmem:[#allocation7 + $0x3c] sm:$0xf]
    %v257 = vlaneseq
    %v258 = vshrl.u32 %v257, 7
    %v259 = vsub.s32 0, %v258
    %v260 = vrot.slane %v106, %v259
    %v277 = vunpack.c.l.b16 %v241
    %v278 = vunpack.c.l.b16 %v242
    %v279 = vunpack.c.l.b16 %v243
    %v280 = vunpack.c.l.b16 %v244
    %v281 = vunpack.c.l.b16 %v245
    %v282 = vunpack.c.l.b16 %v246
    %v283 = vunpack.c.l.b16 %v247
    %v284 = vunpack.c.l.b16 %v248
    %v285 = vunpack.c.l.b16 %v249
    %v286 = vunpack.c.l.b16 %v250
    %v287 = vunpack.c.l.b16 %v251
    %v288 = vunpack.c.l.b16 %v252
    %v289 = vunpack.c.l.b16 %v253
    %v290 = vunpack.c.l.b16 %v254
    %v291 = vunpack.c.l.b16 %v255
    %v292 = vunpack.c.l.b16 %v256
    %v293 = vpack.c.b16 %v278, %v277
    %v294 = vpack.c.b16 %v280, %v279
    %v295 = vpack.c.b16 %v282, %v281
    %v296 = vpack.c.b16 %v284, %v283
    %v297 = vpack.c.b16 %v286, %v285
    %v298 = vpack.c.b16 %v288, %v287
    %v299 = vpack.c.b16 %v290, %v289
    %v300 = vpack.c.b16 %v292, %v291
    %309 = vmatprep.subr.bf16.mxu0 0
    %310 = vmatpush1.bf16.msra.mxu0 %v293
    %311 = vmatprep.subr.bf16.mxu0 0
    %312 = vmatpush1.bf16.msra.mxu0 %v294
    %313 = vmatprep.subr.bf16.mxu0 0
    %314 = vmatpush1.bf16.msra.mxu0 %v295
    %315 = vmatprep.subr.bf16.mxu0 0
    %316 = vmatpush1.bf16.msra.mxu0 %v296
    %317 = vmatprep.subr.bf16.mxu0 0
    %318 = vmatpush1.bf16.msra.mxu0 %v297
    %319 = vmatprep.subr.bf16.mxu0 0
    %320 = vmatpush1.bf16.msra.mxu0 %v298
    %321 = vmatprep.subr.bf16.mxu0 0
    %322 = vmatpush1.bf16.msra.mxu0 %v299
    %323 = vmatprep.subr.bf16.mxu0 0
    %324 = vmatpush1.bf16.msra.mxu0 %v300
    %325 = vmatprep.subr.bf16.mxu0 0
    %326 = vmatpush1.bf16.msra.mxu0 0
    %327 = vmatprep.subr.bf16.mxu0 0
    %328 = vmatpush1.bf16.msra.mxu0 0
    %329 = vmatprep.subr.bf16.mxu0 0
    %330 = vmatpush1.bf16.msra.mxu0 0
    %331 = vmatprep.subr.bf16.mxu0 0
    %332 = vmatpush1.bf16.msra.mxu0 0
    %333 = vmatprep.subr.bf16.mxu0 0
    %334 = vmatpush1.bf16.msra.mxu0 0
    %335 = vmatprep.subr.bf16.mxu0 0
    %336 = vmatpush1.bf16.msra.mxu0 0
    %337 = vmatprep.subr.bf16.mxu0 0
    %338 = vmatpush1.bf16.msra.mxu0 0
    %339 = vmatprep.subr.bf16.mxu0 0
    %340 = vmatpush1.bf16.msra.mxu0 0
    %341 = vmatprep.mubr.bf16.mxu0 0
    %342 = vmatmul.mubr.bf16.gmra.mrb[0].mxu0 %v240
    %v343 = vpop.f32.mrb[0].mxu0
    %v344 = vadd.f32 %v260, %v343
    %v345 = vpop.f32.mrb[0].mxu0
    %v346 = vpop.f32.mrb[0].mxu0
    %v347 = vpop.f32.mrb[0].mxu0
    %348 = vdwg.mxu0
    %v349 = vmul.f32 %v344, 0.5
    %v350 = vmul.f32 %v349, 1.442695
    %v351 = vpow.pop %v350
    %353 = vrot.lane.b32.xlu0 %v351, 112
    %v354 = vpop.permute.xlu0 %353
    %v356 = vmul.f32 %v94, %v354
    %v357 = vadd.f32 %v356, %v344
    %v358 = vpack.c.bf16 %v357, %v357
    %v359 = vld [vmem:[%s6] sm:$0xf]
    %v360 = vld [vmem:[%s6 + $0x4] sm:$0xf]
    %v361 = vld [vmem:[%s7] sm:$0xf]
    %v363 = vsel %vm122, %v361, 0
    %365 = vmatprep.subr.bf16.mxu0 0
    %366 = vmatpush1.bf16.msra.mxu0 %v363
    %367 = vmatprep.subr.bf16.mxu0 0
    %368 = vmatpush1.bf16.msra.mxu0 0
    %369 = vmatprep.subr.bf16.mxu0 0
    %370 = vmatpush1.bf16.msra.mxu0 0
    %371 = vmatprep.subr.bf16.mxu0 0
    %372 = vmatpush1.bf16.msra.mxu0 0
    %373 = vmatprep.subr.bf16.mxu0 0
    %374 = vmatpush1.bf16.msra.mxu0 0
    %375 = vmatprep.subr.bf16.mxu0 0
    %376 = vmatpush1.bf16.msra.mxu0 0
    %377 = vmatprep.subr.bf16.mxu0 0
    %378 = vmatpush1.bf16.msra.mxu0 0
    %379 = vmatprep.subr.bf16.mxu0 0
    %380 = vmatpush1.bf16.msra.mxu0 0
    %381 = vmatprep.subr.bf16.mxu0 0
    %382 = vmatpush1.bf16.msra.mxu0 0
    %383 = vmatprep.subr.bf16.mxu0 0
    %384 = vmatpush1.bf16.msra.mxu0 0
    %385 = vmatprep.subr.bf16.mxu0 0
    %386 = vmatpush1.bf16.msra.mxu0 0
    %387 = vmatprep.subr.bf16.mxu0 0
    %388 = vmatpush1.bf16.msra.mxu0 0
    %389 = vmatprep.subr.bf16.mxu0 0
    %390 = vmatpush1.bf16.msra.mxu0 0
    %391 = vmatprep.subr.bf16.mxu0 0
    %392 = vmatpush1.bf16.msra.mxu0 0
    %393 = vmatprep.subr.bf16.mxu0 0
    %394 = vmatpush1.bf16.msra.mxu0 0
    %395 = vmatprep.subr.bf16.mxu0 0
    %396 = vmatpush1.bf16.msra.mxu0 0
    %397 = vmatprep.mubr.bf16.mxu0 0
    %398 = vmatmul.mubr.bf16.gmra.mrb[0].mxu0 %v120
    %v399 = vpop.f32.mrb[0].mxu0
    %v400 = vadd.f32 0.0, %v399
    %v401 = vpop.f32.mrb[0].mxu0
    %v402 = vpop.f32.mrb[0].mxu0
    %v403 = vpop.f32.mrb[0].mxu0
    %404 = vdwg.mxu0
    %v407 = vunpack.c.l.b16 %v359
    %v408 = vunpack.c.l.b16 %v360
    %v409 = vpack.c.b16 %v408, %v407
    %vm411 = vcmask 130048
    %v413 = vsel %vm411, %v358, 0
    %415 = vmatprep.subr.bf16.mxu0 0
    %416 = vmatpush1.bf16.msra.mxu0 %v409
    %417 = vmatprep.subr.bf16.mxu0 0
    %418 = vmatpush1.bf16.msra.mxu0 0
    %419 = vmatprep.subr.bf16.mxu0 0
    %420 = vmatpush1.bf16.msra.mxu0 0
    %421 = vmatprep.subr.bf16.mxu0 0
    %422 = vmatpush1.bf16.msra.mxu0 0
    %423 = vmatprep.subr.bf16.mxu0 0
    %424 = vmatpush1.bf16.msra.mxu0 0
    %425 = vmatprep.subr.bf16.mxu0 0
    %426 = vmatpush1.bf16.msra.mxu0 0
    %427 = vmatprep.subr.bf16.mxu0 0
    %428 = vmatpush1.bf16.msra.mxu0 0
    %429 = vmatprep.subr.bf16.mxu0 0
    %430 = vmatpush1.bf16.msra.mxu0 0
    %431 = vmatprep.subr.bf16.mxu0 0
    %432 = vmatpush1.bf16.msra.mxu0 0
    %433 = vmatprep.subr.bf16.mxu0 0
    %434 = vmatpush1.bf16.msra.mxu0 0
    %435 = vmatprep.subr.bf16.mxu0 0
    %436 = vmatpush1.bf16.msra.mxu0 0
    %437 = vmatprep.subr.bf16.mxu0 0
    %438 = vmatpush1.bf16.msra.mxu0 0
    %439 = vmatprep.subr.bf16.mxu0 0
    %440 = vmatpush1.bf16.msra.mxu0 0
    %441 = vmatprep.subr.bf16.mxu0 0
    %442 = vmatpush1.bf16.msra.mxu0 0
    %443 = vmatprep.subr.bf16.mxu0 0
    %444 = vmatpush1.bf16.msra.mxu0 0
    %445 = vmatprep.subr.bf16.mxu0 0
    %446 = vmatpush1.bf16.msra.mxu0 0
    %447 = vmatprep.mubr.bf16.mxu0 0
    %448 = vmatmul.mubr.bf16.gmra.mrb[0].mxu0 %v413
    %v449 = vpop.f32.mrb[0].mxu0
    %v450 = vadd.f32 %v400, %v449
    %v451 = vpop.f32.mrb[0].mxu0
    %v452 = vpop.f32.mrb[0].mxu0
    %v453 = vpop.f32.mrb[0].mxu0
    %454 = vdwg.mxu0
    %v455 = vlaneseq
    %v456 = vshrl.u32 %v455, 7
    %v457 = vsub.s32 0, %v456
    %v458 = vrot.slane %v107, %v457
    %v459 = vadd.f32 %v450, %v458
    %v460 = vmax.f32 %v459, 0.0
    %v461 = vpack.c.bf16 %v460, %v460
    %v462 = vld [vmem:[#allocation8] sm:$0xf]
    %v463 = vld [vmem:[#allocation8 + $0x4] sm:$0xf]
    %v464 = vld [vmem:[#allocation8 + $0x8] sm:$0xf]
    %v465 = vld [vmem:[#allocation8 + $0xc] sm:$0xf]
    %v466 = vld [vmem:[#allocation8 + $0x10] sm:$0xf]
    %v467 = vld [vmem:[#allocation8 + $0x14] sm:$0xf]
    %v468 = vld [vmem:[#allocation8 + $0x18] sm:$0xf]
    %v469 = vld [vmem:[#allocation8 + $0x1c] sm:$0xf]
    %v470 = vld [vmem:[#allocation8 + $0x20] sm:$0xf]
    %v471 = vld [vmem:[#allocation8 + $0x24] sm:$0xf]
    %v472 = vld [vmem:[#allocation8 + $0x28] sm:$0xf]
    %v473 = vld [vmem:[#allocation8 + $0x2c] sm:$0xf]
    %v474 = vld [vmem:[#allocation8 + $0x30] sm:$0xf]
    %v475 = vld [vmem:[#allocation8 + $0x34] sm:$0xf]
    %v476 = vld [vmem:[#allocation8 + $0x38] sm:$0xf]
    %v477 = vld [vmem:[#allocation8 + $0x3c] sm:$0xf]
    %v478 = vlaneseq
    %v479 = vshrl.u32 %v478, 7
    %v480 = vsub.s32 0, %v479
    %v481 = vrot.slane %v108, %v480
    %v498 = vunpack.c.l.b16 %v462
    %v499 = vunpack.c.l.b16 %v463
    %v500 = vunpack.c.l.b16 %v464
    %v501 = vunpack.c.l.b16 %v465
    %v502 = vunpack.c.l.b16 %v466
    %v503 = vunpack.c.l.b16 %v467
    %v504 = vunpack.c.l.b16 %v468
    %v505 = vunpack.c.l.b16 %v469
    %v506 = vunpack.c.l.b16 %v470
    %v507 = vunpack.c.l.b16 %v471
    %v508 = vunpack.c.l.b16 %v472
    %v509 = vunpack.c.l.b16 %v473
    %v510 = vunpack.c.l.b16 %v474
    %v511 = vunpack.c.l.b16 %v475
    %v512 = vunpack.c.l.b16 %v476
    %v513 = vunpack.c.l.b16 %v477
    %v514 = vpack.c.b16 %v499, %v498
    %v515 = vpack.c.b16 %v501, %v500
    %v516 = vpack.c.b16 %v503, %v502
    %v517 = vpack.c.b16 %v505, %v504
    %v518 = vpack.c.b16 %v507, %v506
    %v519 = vpack.c.b16 %v509, %v508
    %v520 = vpack.c.b16 %v511, %v510
    %v521 = vpack.c.b16 %v513, %v512
    %530 = vmatprep.subr.bf16.mxu0 0
    %531 = vmatpush1.bf16.msra.mxu0 %v514
    %532 = vmatprep.subr.bf16.mxu0 0
    %533 = vmatpush1.bf16.msra.mxu0 %v515
    %534 = vmatprep.subr.bf16.mxu0 0
    %535 = vmatpush1.bf16.msra.mxu0 %v516
    %536 = vmatprep.subr.bf16.mxu0 0
    %537 = vmatpush1.bf16.msra.mxu0 %v517
    %538 = vmatprep.subr.bf16.mxu0 0
    %539 = vmatpush1.bf16.msra.mxu0 %v518
    %540 = vmatprep.subr.bf16.mxu0 0
    %541 = vmatpush1.bf16.msra.mxu0 %v519
    %542 = vmatprep.subr.bf16.mxu0 0
    %543 = vmatpush1.bf16.msra.mxu0 %v520
    %544 = vmatprep.subr.bf16.mxu0 0
    %545 = vmatpush1.bf16.msra.mxu0 %v521
    %546 = vmatprep.subr.bf16.mxu0 0
    %547 = vmatpush1.bf16.msra.mxu0 0
    %548 = vmatprep.subr.bf16.mxu0 0
    %549 = vmatpush1.bf16.msra.mxu0 0
    %550 = vmatprep.subr.bf16.mxu0 0
    %551 = vmatpush1.bf16.msra.mxu0 0
    %552 = vmatprep.subr.bf16.mxu0 0
    %553 = vmatpush1.bf16.msra.mxu0 0
    %554 = vmatprep.subr.bf16.mxu0 0
    %555 = vmatpush1.bf16.msra.mxu0 0
    %556 = vmatprep.subr.bf16.mxu0 0
    %557 = vmatpush1.bf16.msra.mxu0 0
    %558 = vmatprep.subr.bf16.mxu0 0
    %559 = vmatpush1.bf16.msra.mxu0 0
    %560 = vmatprep.subr.bf16.mxu0 0
    %561 = vmatpush1.bf16.msra.mxu0 0
    %562 = vmatprep.mubr.bf16.mxu0 0
    %563 = vmatmul.mubr.bf16.gmra.mrb[0].mxu0 %v461
    %v564 = vpop.f32.mrb[0].mxu0
    %v565 = vadd.f32 %v481, %v564
    %v566 = vpop.f32.mrb[0].mxu0
    %v567 = vpop.f32.mrb[0].mxu0
    %v568 = vpop.f32.mrb[0].mxu0
    %569 = vdwg.mxu0
    %v570 = vxor.u32 %v565, 2147483648
    %v571 = vmul.f32 %v570, 1.442695
    %v572 = vpow.pop %v571
    %v573 = vadd.f32 %v572, 1.0
    %v574 = vrcp.pop %v573
    %v575 = vmul.f32 1.0, %v574
    %576 = vst [vmem:[#allocation10] sm:$0xff] %v575
    %577 = vst [vmem:[%s11] sm:$0xff] %v344
    // Predicated region
    $region58: #{cvae_forward.1} parent=1 // pred_check
      _
    $region59: #{cvae_forward.1} parent=1 // pred_check_branch
      %579 = sbr.rel (0) target = $region61
    $region60: #{cvae_forward.1} parent=1 // pred_region
      %s581 = ssub.s32 128, 128
      %582 = vsyncadd [#allocation4], %s581
      %s584 = sshll.u32 [#allocation10], 4
      %s585 = int_to_ptr.vmem [resolvable:$true] %s584
      %587 = dma.vmem_to_hbm [thread:$0]  %s585, 128, %s10, [#allocation4]
    $region61: #{cvae_forward.1} parent=1 // pred_fallthru
      _
    // Predicated region
    $region62: #{cvae_forward.1} parent=1 // pred_check
      _
    $region63: #{cvae_forward.1} parent=1 // pred_check_branch
      %589 = sbr.rel (0) target = $region65
    $region64: #{cvae_forward.1} parent=1 // pred_region
      _
    $region65: #{cvae_forward.1} parent=1 // pred_fallthru
      _
    // Predicated region
    $region66: #{cvae_forward.1} parent=1 // pred_check
      _
    $region67: #{cvae_forward.1} parent=1 // pred_check_branch
      %591 = sbr.rel (0) target = $region69
    $region68: #{cvae_forward.1} parent=1 // pred_region
      %592 = dma.done [#allocation4], 128
    $region69: #{cvae_forward.1} parent=1 // pred_fallthru
      _
    // Predicated region
    $region70: #{cvae_forward.1} parent=1 // pred_check
      _
    $region71: #{cvae_forward.1} parent=1 // pred_check_branch
      %594 = sbr.rel (0) target = $region73
    $region72: #{cvae_forward.1} parent=1 // pred_region
      _
    $region73: #{cvae_forward.1} parent=1 // pred_fallthru
      _
    %595 = vsyncpa [#allocation3], 1
    %596 = vsyncpa [#allocation6], 1
    %597 = vsyncpa [#allocation9], 1
    %598 = vsyncpa [#allocation4], 1

</llo_original>
